<compile_context>
chip_gen: v6e
topology: v6e:2x2x1
jax: 0.10.0
libtpu: 0.0.40
codegen_flags: <defaults>
</compile_context>

<pallas_src>
import math

import jax
import jax.numpy as jnp
from jax.experimental import pallas as pl
from jax.experimental.pallas import tpu as pltpu


def _round_up(x, m):
    return (x + m - 1) // m * m


# --------------------------- kernel bodies -----------------------------------

def _ffn_kernel_resident(x_ref, w1_ref, b1_ref, w2_ref, b2_ref, o_ref):
    """Whole hidden dim resident in VMEM: one fused step per M tile."""
    h = jnp.dot(x_ref[...], w1_ref[...], preferred_element_type=jnp.float32)
    h = jnp.maximum(h + b1_ref[...], 0.0)
    y = jnp.dot(h.astype(w2_ref.dtype), w2_ref[...],
                preferred_element_type=jnp.float32)
    o_ref[...] = (y + b2_ref[...]).astype(o_ref.dtype)


def _ffn_kernel_tiled_f32out(x_ref, w1_ref, b1_ref, w2_ref, b2_ref, o_ref):
    """dff tiled; accumulate directly into the k-resident f32 output block."""
    k = pl.program_id(1)

    @pl.when(k == 0)
    def _():
        o_ref[...] = jnp.zeros_like(o_ref)

    h = jnp.dot(x_ref[...], w1_ref[...], preferred_element_type=jnp.float32)
    h = jnp.maximum(h + b1_ref[...], 0.0)
    o_ref[...] += jnp.dot(h.astype(w2_ref.dtype), w2_ref[...],
                          preferred_element_type=jnp.float32)

    @pl.when(k == pl.num_programs(1) - 1)
    def _():
        o_ref[...] += b2_ref[...]


def _ffn_kernel_tiled_acc(x_ref, w1_ref, b1_ref, w2_ref, b2_ref, o_ref,
                          acc_ref):
    """dff tiled; f32 scratch accumulator, cast/store at the last k step."""
    k = pl.program_id(1)

    @pl.when(k == 0)
    def _():
        acc_ref[...] = jnp.zeros_like(acc_ref)

    h = jnp.dot(x_ref[...], w1_ref[...], preferred_element_type=jnp.float32)
    h = jnp.maximum(h + b1_ref[...], 0.0)
    acc_ref[...] += jnp.dot(h.astype(w2_ref.dtype), w2_ref[...],
                            preferred_element_type=jnp.float32)

    @pl.when(k == pl.num_programs(1) - 1)
    def _():
        o_ref[...] = (acc_ref[...] + b2_ref[...]).astype(o_ref.dtype)


# --------------------------- config helpers ----------------------------------

def _vmem_budget_bytes():
    """Per-core VMEM we allow the kernel, leaving headroom for Mosaic scratch.

    128 MiB parts (v5e/v6e) -> ~112 MiB; 64 MiB parts (v7x) -> ~48 MiB.
    """
    cap = 128 << 20
    try:
        info = pltpu.get_tpu_info()
        cap = int(getattr(info, "vmem_capacity_bytes", cap))
    except Exception:
        pass
    return max(32 << 20, cap - (16 << 20))


def _pick_tiles(M, d_model_p, dff_p, cb, ob, budget, tm_hint, tdff_hint):
    """Pick (tm, tdff, weights_resident) that fits the VMEM budget."""
    tm_top = min(_round_up(max(M, 8), 8), _round_up(max(tm_hint, 8), 8))
    tm_cands = []
    t = tm_top
    while True:
        tm_cands.append(t)
        if t <= 8:
            break
        t = max(8, t // 2)

    def resident_est(tm):
        return (2 * tm * d_model_p * cb          # x double-buffer
                + 2 * d_model_p * dff_p * cb     # w1 (2x budgeted, safe)
                + 2 * dff_p * 4                  # b1
                + 2 * dff_p * d_model_p * cb     # w2
                + 2 * d_model_p * 4              # b2
                + 2 * tm * d_model_p * ob        # out double-buffer
                + tm * dff_p * (4 + cb))         # f32 h + bf16/f32 cast copy

    for tm in tm_cands:
        if resident_est(tm) <= budget:
            return tm, dff_p, True

    # Fallback: tile dff. tdff must be a multiple of 128 dividing dff_p.
    n128 = dff_p // 128
    tdff_cands = sorted(
        {128 * d for d in range(1, n128 + 1)
         if n128 % d == 0 and 128 * d <= max(tdff_hint, 128)},
        reverse=True) or [128]

    def tiled_est(tm, tdff):
        return (2 * tm * d_model_p * cb
                + 2 * d_model_p * tdff * cb
                + 2 * tdff * 4
                + 2 * tdff * d_model_p * cb
                + 2 * d_model_p * 4
                + 2 * tm * d_model_p * ob
                + tm * d_model_p * 4             # acc (upper bound)
                + tm * tdff * (4 + cb))          # f32 h + cast copy

    for tm in tm_cands:
        for tdff in tdff_cands:
            if tiled_est(tm, tdff) <= budget:
                return tm, tdff, False
    return 8, 128, False


# --------------------------- public API ---------------------------------------

def prepare_ffn_params(w1, b1, w2, b2, *, compute_dtype=None):
    """Pad weights/biases to lane-dense (...x128) shapes and cast ONCE.

    Call once per layer (outside the per-token path) so per-call work is
    limited to reshaping/casting x. Weight layout: w1 (d_model, dff),
    w2 (dff, d_model), i.e. already transposed vs torch.nn.Linear.weight.
    Zero padding is exact: padded columns of w1/b1 give ReLU(0)=0 which
    contributes nothing through w2, and padded output columns are sliced off.
    """
    d_model, dff = w1.shape
    assert w2.shape == (dff, d_model)
    assert b1.shape == (dff,) and b2.shape == (d_model,)
    if compute_dtype is None:
        compute_dtype = w1.dtype

    d_model_p = _round_up(d_model, 128)
    dff_p = _round_up(dff, 128)

    w1p = jnp.pad(w1, ((0, d_model_p - d_model),
                       (0, dff_p - dff))).astype(compute_dtype)
    w2p = jnp.pad(w2, ((0, dff_p - dff),
                       (0, d_model_p - d_model))).astype(compute_dtype)
    b1p = jnp.pad(b1, (0, dff_p - dff)).reshape(1, dff_p).astype(jnp.float32)
    b2p = jnp.pad(b2, (0, d_model_p - d_model)).reshape(1, d_model_p).astype(
        jnp.float32)

    return dict(w1=w1p, b1=b1p, w2=w2p, b2=b2p, d_model=d_model, dff=dff)


def ffn_pallas_prepared(x, params, *, tm=512, tdff=1024, tile_override=None,
                        vmem_budget_bytes=None):
    """Fused FFN forward: x (batch, seq, d_model) -> (batch, seq, d_model).

    params: output of prepare_ffn_params (padded/cast once per layer).
    tm / tdff: tile-size hints; the actual tiles are auto-shrunk to fit the
               generation-specific VMEM budget.
    tile_override: (tm, tdff) forces the dff-tiled path (testing / tuning).
    """
    batch, seq, d_model = x.shape
    assert d_model == params["d_model"]
    w1p, b1p, w2p, b2p = params["w1"], params["b1"], params["w2"], params["b2"]
    d_model_p, dff_p = w1p.shape
    compute_dtype = w1p.dtype
    out_dtype = x.dtype

    M = batch * seq
    budget = (vmem_budget_bytes if vmem_budget_bytes is not None
              else _vmem_budget_bytes())
    cb = jnp.dtype(compute_dtype).itemsize
    ob = jnp.dtype(out_dtype).itemsize

    if tile_override is not None:
        tm_eff, tdff_eff = tile_override
        assert tm_eff % 8 == 0 and tdff_eff % 128 == 0
        assert dff_p % tdff_eff == 0
        resident = False
    else:
        tm_eff, tdff_eff, resident = _pick_tiles(
            M, d_model_p, dff_p, cb, ob, budget, tm, tdff)
        # Megacore: with weights VMEM-resident, splitting a single oversized
        # M block across both TensorCores costs no extra weight traffic.
        if resident and M > 128 and M <= tm_eff:
            tm_eff = _round_up((M + 1) // 2, 8)

    m_p = _round_up(max(M, 1), tm_eff)
    num_m = m_p // tm_eff
    num_k = dff_p // tdff_eff

    # Only x is padded / cast per call; weights were prepared once.
    x2 = x.reshape(M, d_model)
    x2 = jnp.pad(x2, ((0, m_p - M), (0, d_model_p - d_model)))
    x2 = x2.astype(compute_dtype)

    vmem_limit = int(budget)

    if resident:
        # Constant index_map on w1/w2/b1/b2 -> Pallas DMAs each weight once
        # for the entire grid; only x / out tiles stream per step.
        out2 = pl.pallas_call(
            _ffn_kernel_resident,
            out_shape=jax.ShapeDtypeStruct((m_p, d_model_p), out_dtype),
            grid=(num_m,),
            in_specs=[
                pl.BlockSpec((tm_eff, d_model_p), lambda i: (i, 0)),   # x
                pl.BlockSpec((d_model_p, dff_p), lambda i: (0, 0)),    # w1
                pl.BlockSpec((1, dff_p), lambda i: (0, 0)),            # b1
                pl.BlockSpec((dff_p, d_model_p), lambda i: (0, 0)),    # w2
                pl.BlockSpec((1, d_model_p), lambda i: (0, 0)),        # b2
            ],
            out_specs=pl.BlockSpec((tm_eff, d_model_p), lambda i: (i, 0)),
            compiler_params=pltpu.CompilerParams(
                dimension_semantics=("parallel",),
                vmem_limit_bytes=vmem_limit,
            ),
        )(x2, w1p, b1p, w2p, b2p)
    else:
        if jnp.dtype(out_dtype) == jnp.dtype(jnp.float32):
            kernel = _ffn_kernel_tiled_f32out      # accumulate into o_ref
            scratch = []
        else:
            kernel = _ffn_kernel_tiled_acc         # f32 scratch accumulator
            scratch = [pltpu.VMEM((tm_eff, d_model_p), jnp.float32)]

        out2 = pl.pallas_call(
            kernel,
            out_shape=jax.ShapeDtypeStruct((m_p, d_model_p), out_dtype),
            grid=(num_m, num_k),                   # M outer, dff reduction inner
            in_specs=[
                pl.BlockSpec((tm_eff, d_model_p), lambda i, k: (i, 0)),   # x
                pl.BlockSpec((d_model_p, tdff_eff), lambda i, k: (0, k)),  # w1
                pl.BlockSpec((1, tdff_eff), lambda i, k: (0, k)),          # b1
                pl.BlockSpec((tdff_eff, d_model_p), lambda i, k: (k, 0)),  # w2
                pl.BlockSpec((1, d_model_p), lambda i, k: (0, 0)),         # b2
            ],
            out_specs=pl.BlockSpec((tm_eff, d_model_p), lambda i, k: (i, 0)),
            scratch_shapes=scratch,
            compiler_params=pltpu.CompilerParams(
                dimension_semantics=("parallel", "arbitrary"),
                vmem_limit_bytes=vmem_limit,
            ),
        )(x2, w1p, b1p, w2p, b2p)

    return out2[:M, :d_model].reshape(batch, seq, d_model)


def ffn_pallas(x, w1, b1, w2, b2, *, compute_dtype=None, **kwargs):
    """Convenience wrapper that pads/casts the weights on every call.

    For repeated layer calls, hoist prepare_ffn_params() out of the loop and
    call ffn_pallas_prepared() instead (avoids re-streaming the weights
    through XLA pad/convert before every kernel launch).
    """
    if compute_dtype is None:
        compute_dtype = x.dtype
    params = prepare_ffn_params(w1, b1, w2, b2, compute_dtype=compute_dtype)
    return ffn_pallas_prepared(x, params, **kwargs)


def ffn_reference(x, w1, b1, w2, b2, *, compute_dtype=None):
    """Pure-JAX reference matching the kernel's numerics path."""
    if compute_dtype is None:
        compute_dtype = x.dtype
    xc = x.astype(compute_dtype)
    h = jnp.dot(xc, w1.astype(compute_dtype),
                preferred_element_type=jnp.float32)
    h = jnp.maximum(h + b1.astype(jnp.float32), 0.0)
    y = jnp.dot(h.astype(compute_dtype), w2.astype(compute_dtype),
                preferred_element_type=jnp.float32)
    return (y + b2.astype(jnp.float32)).astype(x.dtype)


def init_linear_params(key, in_features, out_features, dtype=jnp.float32):
    """Deterministic init mimicking torch.nn.Linear (uniform +/- 1/sqrt(in))."""
    kw, kb = jax.random.split(key)
    bound = 1.0 / math.sqrt(in_features)
    # stored as (in, out) so the kernel does x @ w
    w = jax.random.uniform(kw, (in_features, out_features), dtype,
                           minval=-bound, maxval=bound)
    b = jax.random.uniform(kb, (out_features,), dtype,
                           minval=-bound, maxval=bound)
    return w, b


if __name__ == "__main__":
    keys = jax.random.split(jax.random.PRNGKey(0), 9)

    # --- 1) small lane-dense config, f32 compute, weights-resident path ----
    batch, seq, d_model, dff = 2, 8, 128, 256
    x = jax.random.normal(keys[0], (batch, seq, d_model), jnp.float32)
    w1, b1 = init_linear_params(keys[1], d_model, dff, jnp.float32)
    w2, b2 = init_linear_params(keys[2], dff, d_model, jnp.float32)
    params = prepare_ffn_params(w1, b1, w2, b2, compute_dtype=jnp.float32)
    out = jax.block_until_ready(ffn_pallas_prepared(x, params))
    ref = ffn_reference(x, w1, b1, w2, b2)
    assert out.shape == (batch, seq, d_model)
    assert jnp.allclose(out, ref, atol=1e-4, rtol=1e-4), "case 1 mismatch"

    # --- 2) ragged (non multiple-of-128) dims -> exercises padding path ----
    batch2, seq2, dm2, dff2 = 3, 5, 80, 192
    x2 = jax.random.normal(keys[3], (batch2, seq2, dm2), jnp.float32)
    w1b, b1b = init_linear_params(keys[4], dm2, dff2, jnp.float32)
    w2b, b2b = init_linear_params(keys[5], dff2, dm2, jnp.float32)
    out2 = jax.block_until_ready(ffn_pallas(x2, w1b, b1b, w2b, b2b))
    ref2 = ffn_reference(x2, w1b, b1b, w2b, b2b)
    assert out2.shape == (batch2, seq2, dm2)
    assert jnp.allclose(out2, ref2, atol=1e-4, rtol=1e-4), "case 2 mismatch"

    # --- 3) forced dff tiling: f32 in-place accumulation kernel ------------
    batch3, seq3, dm3, dff3 = 4, 16, 128, 512
    x3 = jax.random.normal(keys[6], (batch3, seq3, dm3), jnp.float32)
    w1c, b1c = init_linear_params(keys[7], dm3, dff3, jnp.float32)
    w2c, b2c = init_linear_params(keys[8], dff3, dm3, jnp.float32)
    p3 = prepare_ffn_params(w1c, b1c, w2c, b2c, compute_dtype=jnp.float32)
    out3 = jax.block_until_ready(
        ffn_pallas_prepared(x3, p3, tile_override=(32, 128)))
    ref3 = ffn_reference(x3, w1c, b1c, w2c, b2c)
    assert jnp.allclose(out3, ref3, atol=1e-4, rtol=1e-4), "case 3 mismatch"

    # --- 4) bf16 MXU path with forced tiling: f32 scratch accumulator ------
    x4 = x3.astype(jnp.bfloat16)
    p4 = prepare_ffn_params(w1c, b1c, w2c, b2c, compute_dtype=jnp.bfloat16)
    out4 = jax.block_until_ready(
        ffn_pallas_prepared(x4, p4, tile_override=(32, 128)))
    ref4 = ffn_reference(x4, w1c, b1c, w2c, b2c, compute_dtype=jnp.bfloat16)
    assert jnp.allclose(out4.astype(jnp.float32), ref4.astype(jnp.float32),
                        atol=5e-2, rtol=5e-2), "case 4 mismatch"

    print("KERNEL_OK")
</pallas_src>

<mosaic_0001>
module attributes {stable_mosaic.version = 11 : i64} {
  func.func @_ffn_kernel_resident(%arg0: i32, %arg1: memref<16x128xf32, #tpu.memory_space<vmem>>, %arg2: memref<128x256xf32, #tpu.memory_space<vmem>>, %arg3: memref<1x256xf32, #tpu.memory_space<vmem>>, %arg4: memref<256x128xf32, #tpu.memory_space<vmem>>, %arg5: memref<1x128xf32, #tpu.memory_space<vmem>>, %arg6: memref<16x128xf32, #tpu.memory_space<vmem>>) attributes {dimension_semantics = [#tpu.dimension_semantics<parallel>], iteration_bounds = array<i64: 1>, scalar_prefetch = 0 : i64, scratch_operands = 0 : i64, tpu.core_type = #tpu.core_type<tc>, window_params = [{transform_indices = @transform_0, window_bounds = array<i64: 16, 128>}, {pipeline_mode = #tpu.pipeline_mode<synchronous>, transform_indices = @transform_1, window_bounds = array<i64: 128, 256>}, {pipeline_mode = #tpu.pipeline_mode<synchronous>, transform_indices = @transform_2, window_bounds = array<i64: 1, 256>}, {pipeline_mode = #tpu.pipeline_mode<synchronous>, transform_indices = @transform_3, window_bounds = array<i64: 256, 128>}, {pipeline_mode = #tpu.pipeline_mode<synchronous>, transform_indices = @transform_4, window_bounds = array<i64: 1, 128>}, {transform_indices = @transform_5, window_bounds = array<i64: 16, 128>}]} {
    %c0 = arith.constant 0 : index
    %c0_0 = arith.constant 0 : index
    %0 = vector.load %arg1[%c0, %c0_0] : memref<16x128xf32, #tpu.memory_space<vmem>>, vector<16x128xf32>
    %c0_1 = arith.constant 0 : index
    %c0_2 = arith.constant 0 : index
    %1 = vector.load %arg2[%c0_1, %c0_2] : memref<128x256xf32, #tpu.memory_space<vmem>>, vector<128x256xf32>
    %cst = arith.constant dense<0.000000e+00> : vector<16x256xf32>
    %2 = tpu.matmul %0, %1, %cst {dimension_numbers = #tpu.dot_dimension_numbers<[1], [0], [0], [1], [0, 0, 1, 1], [], []>} : vector<16x128xf32>, vector<128x256xf32>, vector<16x256xf32> -> vector<16x256xf32>
    %c0_3 = arith.constant 0 : index
    %c0_4 = arith.constant 0 : index
    %3 = vector.load %arg3[%c0_3, %c0_4] : memref<1x256xf32, #tpu.memory_space<vmem>>, vector<1x256xf32>
    %4 = vector.broadcast %3 : vector<1x256xf32> to vector<16x256xf32>
    %5 = arith.addf %2, %4 : vector<16x256xf32>
    %cst_5 = arith.constant 0.000000e+00 : f32
    %6 = vector.broadcast %cst_5 : f32 to vector<16x256xf32>
    %7 = arith.maximumf %5, %6 : vector<16x256xf32>
    %c0_6 = arith.constant 0 : index
    %c0_7 = arith.constant 0 : index
    %8 = vector.load %arg4[%c0_6, %c0_7] : memref<256x128xf32, #tpu.memory_space<vmem>>, vector<256x128xf32>
    %cst_8 = arith.constant dense<0.000000e+00> : vector<16x128xf32>
    %9 = tpu.matmul %7, %8, %cst_8 {dimension_numbers = #tpu.dot_dimension_numbers<[1], [0], [0], [1], [0, 0, 1, 1], [], []>} : vector<16x256xf32>, vector<256x128xf32>, vector<16x128xf32> -> vector<16x128xf32>
    %c0_9 = arith.constant 0 : index
    %c0_10 = arith.constant 0 : index
    %10 = vector.load %arg5[%c0_9, %c0_10] : memref<1x128xf32, #tpu.memory_space<vmem>>, vector<1x128xf32>
    %11 = vector.broadcast %10 : vector<1x128xf32> to vector<16x128xf32>
    %12 = arith.addf %9, %11 : vector<16x128xf32>
    %c0_11 = arith.constant 0 : index
    %c0_12 = arith.constant 0 : index
    %13 = vector.load %arg6[%c0_11, %c0_12] : memref<16x128xf32, #tpu.memory_space<vmem>>, vector<16x128xf32>
    tpu.vector_store %arg6[%c0_11, %c0_12], %12 {strides = array<i32>} : memref<16x128xf32, #tpu.memory_space<vmem>>, vector<16x128xf32>,
    return
  }
  func.func @transform_0(%arg0: i32) -> (i32, i32) {
    %c0_i32 = arith.constant 0 : i32
    %c0_i32_0 = arith.constant 0 : i32
    return %arg0, %c0_i32 : i32, i32
  }
  func.func @transform_1(%arg0: i32) -> (i32, i32) {
    %c0_i32 = arith.constant 0 : i32
    %c0_i32_0 = arith.constant 0 : i32
    %c0_i32_1 = arith.constant 0 : i32
    return %c0_i32, %c0_i32_0 : i32, i32
  }
  func.func @transform_2(%arg0: i32) -> (i32, i32) {
    %c0_i32 = arith.constant 0 : i32
    %c0_i32_0 = arith.constant 0 : i32
    %c0_i32_1 = arith.constant 0 : i32
    return %c0_i32, %c0_i32_0 : i32, i32
  }
  func.func @transform_3(%arg0: i32) -> (i32, i32) {
    %c0_i32 = arith.constant 0 : i32
    %c0_i32_0 = arith.constant 0 : i32
    %c0_i32_1 = arith.constant 0 : i32
    return %c0_i32, %c0_i32_0 : i32, i32
  }
  func.func @transform_4(%arg0: i32) -> (i32, i32) {
    %c0_i32 = arith.constant 0 : i32
    %c0_i32_0 = arith.constant 0 : i32
    %c0_i32_1 = arith.constant 0 : i32
    return %c0_i32, %c0_i32_0 : i32, i32
  }
  func.func @transform_5(%arg0: i32) -> (i32, i32) {
    %c0_i32 = arith.constant 0 : i32
    %c0_i32_0 = arith.constant 0 : i32
    return %arg0, %c0_i32 : i32, i32
  }
}

</mosaic_0001>

<llo_original>
// kernel: tpu_custom_call.1
$region0: #{tpu_custom_call.1}
  #allocation0 [shape = 'u32[]', space=smem, size = 0x4, offset = 0x4, fixed_abs, tag = 'smem constant byte address 0x4 - core index']
  #allocation1 [shape = 'u32[144,128]{1,0:T(1,128)}', space=vmem, size = 0x12000, scoped, tag = 'internal scratch']
  %s0 = inlined_call_operand.hbm [shape: f32[16,128], index: 0, kind: input, shape index: {}]
  %s1 = inlined_call_operand.hbm [shape: f32[128,256], index: 1, kind: input, shape index: {}]
  %s2 = inlined_call_operand.vmem [shape: f32[1,256], index: 2, kind: input, shape index: {}]
  %s3 = inlined_call_operand.hbm [shape: f32[256,128], index: 3, kind: input, shape index: {}]
  %s4 = inlined_call_operand.vmem [shape: f32[1,128], index: 4, kind: input, shape index: {}]
  %s5 = inlined_call_operand.hbm [shape: f32[16,128], index: 5, kind: output, shape index: {}]
  %s6 = sld [smem:[#allocation0]]
  $region42: #{tpu_custom_call.1} parent=0
    _
  %s8 = ssub.s32 1, %s6
  %s9 = scalar_select 0, %s8, %s6
  $region1: #{tpu_custom_call.1} parent=0
    #allocation2 [shape = 'u8[8192]{0}', space=vmem, size = 0x2000, scoped, tag = 'input window, operand 0, single buffered']
    #allocation3 [shape = 's32[1]{0}', space=sflag, size = 0x4, scoped, tag = 'scoped memory for tpu_custom_call.1']
    #allocation4 [shape = 's32[1]{0}', space=sflag, size = 0x4, scoped, tag = 'scoped memory for tpu_custom_call.1']
    #allocation5 [shape = 'u8[131072]{0}', space=vmem, size = 0x20000, scoped, tag = 'input window, operand 1, single buffered']
    #allocation6 [shape = 's32[1]{0}', space=sflag, size = 0x4, scoped, tag = 'scoped memory for tpu_custom_call.1']
    #allocation7 [shape = 'u8[131072]{0}', space=vmem, size = 0x20000, scoped, tag = 'input window, operand 3, single buffered']
    #allocation8 [shape = 'u8[8192]{0}', space=vmem, size = 0x2000, scoped, tag = 'output window, operand 0, single buffered']
    %10 = vsyncpa [#allocation3], 0
    %11 = vsyncpa [#allocation6], 0
    %12 = vsyncpa [#allocation4], 0
    // Predicated region
    $region2: #{tpu_custom_call.1} parent=1 // pred_check
      _
    $region3: #{tpu_custom_call.1} parent=1 // pred_check_branch
      %14 = sbr.rel (0) target = $region5
    $region4: #{tpu_custom_call.1} parent=1 // pred_region
      %s16 = ssub.s32 256, 256
      %17 = vsyncadd [#allocation3], %s16
      %s18 = sshll.u32 [#allocation2], 4
      %s19 = int_to_ptr.vmem [resolvable:$true] %s18
      %24 = dma.hbm_to_vmem [thread:$0]  %s0, 256, %s19, [#allocation3], 128, 128, 8
    $region5: #{tpu_custom_call.1} parent=1 // pred_fallthru
      _
    // Predicated region
    $region6: #{tpu_custom_call.1} parent=1 // pred_check
      _
    $region7: #{tpu_custom_call.1} parent=1 // pred_check_branch
      %26 = sbr.rel (0) target = $region9
    $region8: #{tpu_custom_call.1} parent=1 // pred_region
      %s28 = ssub.s32 4096, 4096
      %29 = vsyncadd [#allocation6], %s28
      %s30 = sshll.u32 [#allocation5], 4
      %s31 = int_to_ptr.vmem [resolvable:$true] %s30
      %36 = dma.hbm_to_vmem [thread:$0]  %s1, 4096, %s31, [#allocation6], 256, 256, 16
    $region9: #{tpu_custom_call.1} parent=1 // pred_fallthru
      _
    // Predicated region
    $region10: #{tpu_custom_call.1} parent=1 // pred_check
      _
    $region11: #{tpu_custom_call.1} parent=1 // pred_check_branch
      %38 = sbr.rel (0) target = $region13
    $region12: #{tpu_custom_call.1} parent=1 // pred_region
      _
    $region13: #{tpu_custom_call.1} parent=1 // pred_fallthru
      _
    // Predicated region
    $region14: #{tpu_custom_call.1} parent=1 // pred_check
      _
    $region15: #{tpu_custom_call.1} parent=1 // pred_check_branch
      %40 = sbr.rel (0) target = $region17
    $region16: #{tpu_custom_call.1} parent=1 // pred_region
      %s42 = ssub.s32 4096, 4096
      %43 = vsyncadd [#allocation6], %s42
      %s44 = sshll.u32 [#allocation7], 4
      %s45 = int_to_ptr.vmem [resolvable:$true] %s44
      %50 = dma.hbm_to_vmem [thread:$0]  %s3, 4096, %s45, [#allocation6], 128, 128, 8
    $region17: #{tpu_custom_call.1} parent=1 // pred_fallthru
      _
    // Predicated region
    $region18: #{tpu_custom_call.1} parent=1 // pred_check
      _
    $region19: #{tpu_custom_call.1} parent=1 // pred_check_branch
      %52 = sbr.rel (0) target = $region21
    $region20: #{tpu_custom_call.1} parent=1 // pred_region
      _
    $region21: #{tpu_custom_call.1} parent=1 // pred_fallthru
      _
    // Predicated region
    $region22: #{tpu_custom_call.1} parent=1 // pred_check
      _
    $region23: #{tpu_custom_call.1} parent=1 // pred_check_branch
      %54 = sbr.rel (0) target = $region25
    $region24: #{tpu_custom_call.1} parent=1 // pred_region
      %55 = dma.done [#allocation3], 256
    $region25: #{tpu_custom_call.1} parent=1 // pred_fallthru
      _
    // Predicated region
    $region26: #{tpu_custom_call.1} parent=1 // pred_check
      _
    $region27: #{tpu_custom_call.1} parent=1 // pred_check_branch
      %57 = sbr.rel (0) target = $region29
    $region28: #{tpu_custom_call.1} parent=1 // pred_region
      %58 = dma.done [#allocation6], 4096
    $region29: #{tpu_custom_call.1} parent=1 // pred_fallthru
      _
    // Predicated region
    $region30: #{tpu_custom_call.1} parent=1 // pred_check
      _
    $region31: #{tpu_custom_call.1} parent=1 // pred_check_branch
      %60 = sbr.rel (0) target = $region33
    $region32: #{tpu_custom_call.1} parent=1 // pred_region
      %61 = dma.done [#allocation6], 4096
    $region33: #{tpu_custom_call.1} parent=1 // pred_fallthru
      _
    %v62 = vld [vmem:[#allocation2] sm:$0xff]
    %v63 = vld [vmem:[#allocation2 + $0x8] sm:$0xff]
    %v64 = vld [vmem:[#allocation5] sm:$0xff]
    %v65 = vld [vmem:[#allocation5 + $0x8] sm:$0xff]
    %v66 = vld [vmem:[#allocation5 + $0x10] sm:$0xff]
    %v67 = vld [vmem:[#allocation5 + $0x18] sm:$0xff]
    %v68 = vld [vmem:[#allocation5 + $0x20] sm:$0xff]
    %v69 = vld [vmem:[#allocation5 + $0x28] sm:$0xff]
    %v70 = vld [vmem:[#allocation5 + $0x30] sm:$0xff]
    %v71 = vld [vmem:[#allocation5 + $0x38] sm:$0xff]
    %v72 = vld [vmem:[#allocation5 + $0x40] sm:$0xff]
    %v73 = vld [vmem:[#allocation5 + $0x48] sm:$0xff]
    %v74 = vld [vmem:[#allocation5 + $0x50] sm:$0xff]
    %v75 = vld [vmem:[#allocation5 + $0x58] sm:$0xff]
    %v76 = vld [vmem:[#allocation5 + $0x60] sm:$0xff]
    %v77 = vld [vmem:[#allocation5 + $0x68] sm:$0xff]
    %v78 = vld [vmem:[#allocation5 + $0x70] sm:$0xff]
    %v79 = vld [vmem:[#allocation5 + $0x78] sm:$0xff]
    %v80 = vld [vmem:[#allocation5 + $0x80] sm:$0xff]
    %v81 = vld [vmem:[#allocation5 + $0x88] sm:$0xff]
    %v82 = vld [vmem:[#allocation5 + $0x90] sm:$0xff]
    %v83 = vld [vmem:[#allocation5 + $0x98] sm:$0xff]
    %v84 = vld [vmem:[#allocation5 + $0xa0] sm:$0xff]
    %v85 = vld [vmem:[#allocation5 + $0xa8] sm:$0xff]
    %v86 = vld [vmem:[#allocation5 + $0xb0] sm:$0xff]
    %v87 = vld [vmem:[#allocation5 + $0xb8] sm:$0xff]
    %v88 = vld [vmem:[#allocation5 + $0xc0] sm:$0xff]
    %v89 = vld [vmem:[#allocation5 + $0xc8] sm:$0xff]
    %v90 = vld [vmem:[#allocation5 + $0xd0] sm:$0xff]
    %v91 = vld [vmem:[#allocation5 + $0xd8] sm:$0xff]
    %v92 = vld [vmem:[#allocation5 + $0xe0] sm:$0xff]
    %v93 = vld [vmem:[#allocation5 + $0xe8] sm:$0xff]
    %v94 = vld [vmem:[#allocation5 + $0xf0] sm:$0xff]
    %v95 = vld [vmem:[#allocation5 + $0xf8] sm:$0xff]
    %v96 = vld [vmem:[%s2] sm:$0x3]
    %v98 = vlaneseq
    %v99 = vshrl.u32 %v98, 7
    %v100 = vsub.s32 0, %v99
    %v101 = vrot.slane %v96, %v100
    %v102 = vlaneseq
    %v103 = vshrl.u32 %v102, 7
    %v104 = vsub.s32 1, %v103
    %v105 = vrot.slane %v96, %v104
    %108 = vmatprep.subr.mxu0 %v95
    %109 = vmatpush1.msra.mxu0 %v94
    %110 = vmatprep.subr.mxu0 %v93
    %111 = vmatpush1.msra.mxu0 %v92
    %112 = vmatprep.subr.mxu0 %v91
    %113 = vmatpush1.msra.mxu0 %v90
    %114 = vmatprep.subr.mxu0 %v89
    %115 = vmatpush1.msra.mxu0 %v88
    %116 = vmatprep.subr.mxu0 %v87
    %117 = vmatpush1.msra.mxu0 %v86
    %118 = vmatprep.subr.mxu0 %v85
    %119 = vmatpush1.msra.mxu0 %v84
    %120 = vmatprep.subr.mxu0 %v83
    %121 = vmatpush1.msra.mxu0 %v82
    %122 = vmatprep.subr.mxu0 %v81
    %123 = vmatpush1.msra.mxu0 %v80
    %124 = vmatprep.subr.mxu0 %v79
    %125 = vmatpush1.msra.mxu0 %v78
    %126 = vmatprep.subr.mxu0 %v77
    %127 = vmatpush1.msra.mxu0 %v76
    %128 = vmatprep.subr.mxu0 %v75
    %129 = vmatpush1.msra.mxu0 %v74
    %130 = vmatprep.subr.mxu0 %v73
    %131 = vmatpush1.msra.mxu0 %v72
    %132 = vmatprep.subr.mxu0 %v71
    %133 = vmatpush1.msra.mxu0 %v70
    %134 = vmatprep.subr.mxu0 %v69
    %135 = vmatpush1.msra.mxu0 %v68
    %136 = vmatprep.subr.mxu0 %v67
    %137 = vmatpush1.msra.mxu0 %v66
    %138 = vmatprep.subr.mxu0 %v65
    %139 = vmatpush1.msra.mxu0 %v64
    %140 = vmatprep.subr.mxu0 0.0
    %141 = vmatpush2.msra.mxu0 0.0
    %142 = vmatprep.subr.mxu0 0.0
    %143 = vmatpush2.msra.mxu0 0.0
    %144 = vmatprep.subr.mxu0 0.0
    %145 = vmatpush2.msra.mxu0 0.0
    %146 = vmatprep.subr.mxu0 0.0
    %147 = vmatpush2.msra.mxu0 0.0
    %148 = vmatprep.subr.mxu0 0.0
    %149 = vmatpush2.msra.mxu0 0.0
    %150 = vmatprep.subr.mxu0 0.0
    %151 = vmatpush2.msra.mxu0 0.0
    %152 = vmatprep.subr.mxu0 0.0
    %153 = vmatpush2.msra.mxu0 0.0
    %154 = vmatprep.subr.mxu0 0.0
    %155 = vmatpush2.msra.mxu0 0.0
    %156 = vmatprep.subr.mxu0 0.0
    %157 = vmatpush2.msra.mxu0 0.0
    %158 = vmatprep.subr.mxu0 0.0
    %159 = vmatpush2.msra.mxu0 0.0
    %160 = vmatprep.subr.mxu0 0.0
    %161 = vmatpush2.msra.mxu0 0.0
    %162 = vmatprep.subr.mxu0 0.0
    %163 = vmatpush2.msra.mxu0 0.0
    %164 = vmatprep.subr.mxu0 0.0
    %165 = vmatpush2.msra.mxu0 0.0
    %166 = vmatprep.subr.mxu0 0.0
    %167 = vmatpush2.msra.mxu0 0.0
    %168 = vmatprep.subr.mxu0 0.0
    %169 = vmatpush2.msra.mxu0 0.0
    %170 = vmatprep.subr.mxu0 0.0
    %171 = vmatpush2.msra.mxu0 0.0
    %172 = vmatprep.mubr.f32.mxu0 0.0
    %173 = vmatmul.mubr.f32.gmra.mxu0 %v62
    %v174 = vpop.f32.mrf.mxu0
    %v175 = vadd.f32 %v101, %v174
    %v176 = vpop.f32.mrf.mxu0
    %v177 = vadd.f32 %v105, %v176
    %178 = vmatprep.mubr.f32.mxu0 0.0
    %179 = vmatmul.mubr.f32.gmra.mxu0 %v63
    %v180 = vpop.f32.mrf.mxu0
    %v181 = vadd.f32 %v101, %v180
    %v182 = vpop.f32.mrf.mxu0
    %v183 = vadd.f32 %v105, %v182
    %184 = vdwg.mxu0
    %v185 = vmax.f32 %v175, 0.0
    %v186 = vmax.f32 %v177, 0.0
    %v187 = vmax.f32 %v181, 0.0
    %v188 = vmax.f32 %v183, 0.0
    %v189 = vld [vmem:[#allocation7] sm:$0xff]
    %v190 = vld [vmem:[#allocation7 + $0x8] sm:$0xff]
    %v191 = vld [vmem:[#allocation7 + $0x10] sm:$0xff]
    %v192 = vld [vmem:[#allocation7 + $0x18] sm:$0xff]
    %v193 = vld [vmem:[#allocation7 + $0x20] sm:$0xff]
    %v194 = vld [vmem:[#allocation7 + $0x28] sm:$0xff]
    %v195 = vld [vmem:[#allocation7 + $0x30] sm:$0xff]
    %v196 = vld [vmem:[#allocation7 + $0x38] sm:$0xff]
    %v197 = vld [vmem:[#allocation7 + $0x40] sm:$0xff]
    %v198 = vld [vmem:[#allocation7 + $0x48] sm:$0xff]
    %v199 = vld [vmem:[#allocation7 + $0x50] sm:$0xff]
    %v200 = vld [vmem:[#allocation7 + $0x58] sm:$0xff]
    %v201 = vld [vmem:[#allocation7 + $0x60] sm:$0xff]
    %v202 = vld [vmem:[#allocation7 + $0x68] sm:$0xff]
    %v203 = vld [vmem:[#allocation7 + $0x70] sm:$0xff]
    %v204 = vld [vmem:[#allocation7 + $0x78] sm:$0xff]
    %v205 = vld [vmem:[#allocation7 + $0x80] sm:$0xff]
    %v206 = vld [vmem:[#allocation7 + $0x88] sm:$0xff]
    %v207 = vld [vmem:[#allocation7 + $0x90] sm:$0xff]
    %v208 = vld [vmem:[#allocation7 + $0x98] sm:$0xff]
    %v209 = vld [vmem:[#allocation7 + $0xa0] sm:$0xff]
    %v210 = vld [vmem:[#allocation7 + $0xa8] sm:$0xff]
    %v211 = vld [vmem:[#allocation7 + $0xb0] sm:$0xff]
    %v212 = vld [vmem:[#allocation7 + $0xb8] sm:$0xff]
    %v213 = vld [vmem:[#allocation7 + $0xc0] sm:$0xff]
    %v214 = vld [vmem:[#allocation7 + $0xc8] sm:$0xff]
    %v215 = vld [vmem:[#allocation7 + $0xd0] sm:$0xff]
    %v216 = vld [vmem:[#allocation7 + $0xd8] sm:$0xff]
    %v217 = vld [vmem:[#allocation7 + $0xe0] sm:$0xff]
    %v218 = vld [vmem:[#allocation7 + $0xe8] sm:$0xff]
    %v219 = vld [vmem:[#allocation7 + $0xf0] sm:$0xff]
    %v220 = vld [vmem:[#allocation7 + $0xf8] sm:$0xff]
    %v221 = vld [vmem:[%s4] sm:$0x1]
    %v223 = vlaneseq
    %v224 = vshrl.u32 %v223, 7
    %v225 = vsub.s32 0, %v224
    %v226 = vrot.slane %v221, %v225
    %228 = vmatprep.subr.mxu0 0.0
    %229 = vmatpush1.msra.mxu0 %v204
    %230 = vmatprep.subr.mxu0 0.0
    %231 = vmatpush1.msra.mxu0 %v203
    %232 = vmatprep.subr.mxu0 0.0
    %233 = vmatpush1.msra.mxu0 %v202
    %234 = vmatprep.subr.mxu0 0.0
    %235 = vmatpush1.msra.mxu0 %v201
    %236 = vmatprep.subr.mxu0 0.0
    %237 = vmatpush1.msra.mxu0 %v200
    %238 = vmatprep.subr.mxu0 0.0
    %239 = vmatpush1.msra.mxu0 %v199
    %240 = vmatprep.subr.mxu0 0.0
    %241 = vmatpush1.msra.mxu0 %v198
    %242 = vmatprep.subr.mxu0 0.0
    %243 = vmatpush1.msra.mxu0 %v197
    %244 = vmatprep.subr.mxu0 0.0
    %245 = vmatpush1.msra.mxu0 %v196
    %246 = vmatprep.subr.mxu0 0.0
    %247 = vmatpush1.msra.mxu0 %v195
    %248 = vmatprep.subr.mxu0 0.0
    %249 = vmatpush1.msra.mxu0 %v194
    %250 = vmatprep.subr.mxu0 0.0
    %251 = vmatpush1.msra.mxu0 %v193
    %252 = vmatprep.subr.mxu0 0.0
    %253 = vmatpush1.msra.mxu0 %v192
    %254 = vmatprep.subr.mxu0 0.0
    %255 = vmatpush1.msra.mxu0 %v191
    %256 = vmatprep.subr.mxu0 0.0
    %257 = vmatpush1.msra.mxu0 %v190
    %258 = vmatprep.subr.mxu0 0.0
    %259 = vmatpush1.msra.mxu0 %v189
    %260 = vmatprep.subr.mxu0 0.0
    %261 = vmatpush2.msra.mxu0 %v220
    %262 = vmatprep.subr.mxu0 0.0
    %263 = vmatpush2.msra.mxu0 %v219
    %264 = vmatprep.subr.mxu0 0.0
    %265 = vmatpush2.msra.mxu0 %v218
    %266 = vmatprep.subr.mxu0 0.0
    %267 = vmatpush2.msra.mxu0 %v217
    %268 = vmatprep.subr.mxu0 0.0
    %269 = vmatpush2.msra.mxu0 %v216
    %270 = vmatprep.subr.mxu0 0.0
    %271 = vmatpush2.msra.mxu0 %v215
    %272 = vmatprep.subr.mxu0 0.0
    %273 = vmatpush2.msra.mxu0 %v214
    %274 = vmatprep.subr.mxu0 0.0
    %275 = vmatpush2.msra.mxu0 %v213
    %276 = vmatprep.subr.mxu0 0.0
    %277 = vmatpush2.msra.mxu0 %v212
    %278 = vmatprep.subr.mxu0 0.0
    %279 = vmatpush2.msra.mxu0 %v211
    %280 = vmatprep.subr.mxu0 0.0
    %281 = vmatpush2.msra.mxu0 %v210
    %282 = vmatprep.subr.mxu0 0.0
    %283 = vmatpush2.msra.mxu0 %v209
    %284 = vmatprep.subr.mxu0 0.0
    %285 = vmatpush2.msra.mxu0 %v208
    %286 = vmatprep.subr.mxu0 0.0
    %287 = vmatpush2.msra.mxu0 %v207
    %288 = vmatprep.subr.mxu0 0.0
    %289 = vmatpush2.msra.mxu0 %v206
    %290 = vmatprep.subr.mxu0 0.0
    %291 = vmatpush2.msra.mxu0 %v205
    %292 = vmatprep.mubr.f32.mxu0 %v186
    %293 = vmatmul.mubr.f32.gmra.mxu0 %v185
    %v294 = vpop.f32.mrf.mxu0
    %v295 = vadd.f32 %v226, %v294
    %v296 = vpop.f32.mrf.mxu0
    %297 = vmatprep.mubr.f32.mxu0 %v188
    %298 = vmatmul.mubr.f32.gmra.mxu0 %v187
    %v299 = vpop.f32.mrf.mxu0
    %v300 = vadd.f32 %v226, %v299
    %v301 = vpop.f32.mrf.mxu0
    %302 = vdwg.mxu0
    %303 = vst [vmem:[#allocation8] sm:$0xff] %v295
    %304 = vst [vmem:[#allocation8 + $0x8] sm:$0xff] %v300
    // Predicated region
    $region34: #{tpu_custom_call.1} parent=1 // pred_check
      _
    $region35: #{tpu_custom_call.1} parent=1 // pred_check_branch
      %306 = sbr.rel (0) target = $region37
    $region36: #{tpu_custom_call.1} parent=1 // pred_region
      %s308 = ssub.s32 256, 256
      %309 = vsyncadd [#allocation4], %s308
      %s310 = sshll.u32 [#allocation8], 4
      %s311 = int_to_ptr.vmem [resolvable:$true] %s310
      %316 = dma.vmem_to_hbm [thread:$0]  %s311, 256, %s5, [#allocation4], 128, 128, 8
    $region37: #{tpu_custom_call.1} parent=1 // pred_fallthru
      _
    // Predicated region
    $region38: #{tpu_custom_call.1} parent=1 // pred_check
      _
    $region39: #{tpu_custom_call.1} parent=1 // pred_check_branch
      %318 = sbr.rel (0) target = $region41
    $region40: #{tpu_custom_call.1} parent=1 // pred_region
      %319 = dma.done [#allocation4], 256
    $region41: #{tpu_custom_call.1} parent=1 // pred_fallthru
      _
    %320 = vsyncpa [#allocation3], 1
    %321 = vsyncpa [#allocation6], 1
    %322 = vsyncpa [#allocation4], 1

</llo_original>
